<compile_context>
chip_gen: v7x
topology: tpu7x:2x2x1
jax: 0.10.0
libtpu: 0.0.40
codegen_flags: <defaults>
</compile_context>

<pallas_src>
from functools import partial

import jax
import jax.numpy as jnp
from jax import lax
from jax.experimental import pallas as pl
from jax.experimental.pallas import tpu as pltpu

LANE = 128
SUBLANE = 8


def _cdiv(a, b):
    return (a + b - 1) // b


def _round_up(n, m):
    return _cdiv(n, m) * m


def _tensorcores_per_chip():
    """Best-effort TensorCore count of the default device (2 on v7x-class
    chips, else 1).  Falls back to 1 if detection is not possible."""
    try:
        kind = jax.devices()[0].device_kind.lower()
        if 'v7' in kind:
            return 2
    except Exception:
        pass
    return 1


def _vals_and_mask(x, margin, norm):
    """Per-element masked values and the threshold mask (f32 inputs)."""
    if norm == 'l1':
        ax = jnp.abs(x)
        m = ax > margin
        return jnp.where(m, ax, 0.0), m
    # l2
    if margin >= 0.0:
        # |x| > margin  <=>  x*x > margin*margin : one fewer VPU op/element.
        x2 = x * x
        m = x2 > (margin * margin)
        return jnp.where(m, x2, 0.0), m
    # margin < 0: the squared comparison is not equivalent, fall back to abs.
    m = jnp.abs(x) > margin
    return jnp.where(m, x * x, 0.0), m


def _masked_moments(v, margin, norm):
    """Plain-JAX masked sum / count for the tiny tail and small-input path."""
    xf = v.astype(jnp.float32)
    mask = jnp.abs(xf) > margin
    vals = jnp.where(mask, jnp.abs(xf) if norm == 'l1' else xf * xf, 0.0)
    return jnp.sum(vals), jnp.sum(mask.astype(jnp.float32))


def _threshold_prior_kernel(x_ref, osum_ref, ocnt_ref, *,
                            margin, norm, tr, cr, rows, nb, bpc, num_cores):
    c = pl.program_id(0)   # core-split axis ("parallel"; size 1 on 1-TC chips)
    i = pl.program_id(1)   # reduction axis ("arbitrary")

    @pl.when(i == 0)
    def _():
        osum_ref[...] = jnp.zeros_like(osum_ref)
        ocnt_ref[...] = jnp.zeros_like(ocnt_ref)

    blk = c * bpc + i                        # global block index (unclamped)
    n_chunks = tr // cr                      # static
    partial_rows = rows - (nb - 1) * tr      # rows in the last block (static)
    has_partial = partial_rows != tr         # static
    has_dummy = num_cores * bpc != nb        # static
    unroll = True if n_chunks <= 16 else 8

    def chunk_body(j, masked):
        if isinstance(j, int):
            start = j * cr
        else:
            start = pl.multiple_of(j * cr, cr)
        x = x_ref[pl.ds(start, cr), :].astype(jnp.float32)
        vals, mask = _vals_and_mask(x, margin, norm)
        cnts = mask.astype(jnp.int32)
        if masked:
            # Ragged last block: zero rows past the end of the data (the
            # boundary DMA is clipped, so those rows hold undefined values).
            row = lax.broadcasted_iota(jnp.int32, (cr, LANE), 0) + start
            ok = row < partial_rows
            vals = jnp.where(ok, vals, 0.0)
            cnts = jnp.where(ok, cnts, 0)
        # Fold the (cr, 128) chunk down to one (8, 128) vreg tile with pure
        # VPU adds; accumulate into the VMEM-resident per-core output block.
        osum_ref[...] += vals.reshape(cr // SUBLANE, SUBLANE, LANE) \
                             .sum(axis=0).reshape(1, SUBLANE, LANE)
        ocnt_ref[...] += cnts.reshape(cr // SUBLANE, SUBLANE, LANE) \
                             .sum(axis=0).reshape(1, SUBLANE, LANE)

    def accum(masked):
        def run():
            if n_chunks == 1:
                chunk_body(0, masked)
            else:
                lax.fori_loop(
                    0, n_chunks,
                    lambda j, carry: (chunk_body(j, masked), carry)[1],
                    0, unroll=unroll)
        return run

    if not has_partial and not has_dummy:
        accum(False)()                                     # every step is a full block
    elif not has_partial:
        pl.when(blk < nb)(accum(False))                    # skip the dummy step only
    elif not has_dummy:
        pl.when(blk != nb - 1)(accum(False))               # full blocks
        pl.when(blk == nb - 1)(accum(True))                # masked last block
    else:
        pl.when(blk < nb - 1)(accum(False))                # full blocks
        pl.when(blk == nb - 1)(accum(True))                # masked last block (dummies skipped)


def threshold_prior(x, *, margin=1.0, norm='l2', epsilon=1e-7,
                    block_rows=8192, chunk_rows=256, num_cores=None):
    """Pallas implementation of ThresholdPrior.forward (returns float32)."""
    assert norm in ('l1', 'l2'), 'Norm variable must me l1 or l2'
    margin = float(margin)

    flat = x.reshape(-1)
    total = int(flat.shape[0])

    n_aligned = (total // LANE) * LANE
    rows = n_aligned // LANE

    # Tiny inputs: the kernel is pure overhead, compute directly in JAX.
    if rows < SUBLANE:
        s, c = _masked_moments(flat, margin, norm)
        return s / (c + jnp.float32(epsilon))

    # Sub-128-element remainder in plain JAX (at most 127 elements).
    if n_aligned < total:
        tail_sum, tail_cnt = _masked_moments(flat[n_aligned:], margin, norm)
    else:
        tail_sum = jnp.float32(0.0)
        tail_cnt = jnp.float32(0.0)

    # --- static tile geometry -------------------------------------------
    tr = max(SUBLANE, (int(block_rows) // SUBLANE) * SUBLANE)
    tr = min(tr, _round_up(rows, SUBLANE))     # don't over-allocate small inputs
    cr = max(SUBLANE, (int(chunk_rows) // SUBLANE) * SUBLANE)
    cr = min(cr, tr)
    tr = _round_up(tr, cr)                     # tr is an exact multiple of cr
    nb = _cdiv(rows, tr)                       # blocks (last one may be ragged)

    if num_cores is None:
        num_cores = _tensorcores_per_chip()
    nce = max(1, min(int(num_cores), nb))      # effective core split
    bpc = _cdiv(nb, nce)                       # blocks per core

    # Lane-dense [rows, 128] view of the aligned prefix: contiguous slice +
    # reshape, so no padding copy / extra HBM pass even for unaligned totals.
    x2d = flat[:n_aligned].reshape(rows, LANE)

    kernel = partial(_threshold_prior_kernel, margin=margin, norm=norm,
                     tr=tr, cr=cr, rows=rows, nb=nb, bpc=bpc, num_cores=nce)

    cost = pl.CostEstimate(
        flops=6 * total, transcendentals=0,
        bytes_accessed=total * x.dtype.itemsize + 2 * nce * SUBLANE * LANE * 4)

    # 4 MiB max tile, double-buffered 8 MiB: well under the 32 MiB scoped
    # VMEM default on v5e/v6e/v7x, so no vmem_limit_bytes override is needed.
    # TODO(synk): on v7x, verify the leading "parallel" axis really shards
    # across both TensorCores; if not, switch it to pltpu.CORE_PARALLEL.
    sums, cnts = pl.pallas_call(
        kernel,
        out_shape=(jax.ShapeDtypeStruct((nce, SUBLANE, LANE), jnp.float32),
                   jax.ShapeDtypeStruct((nce, SUBLANE, LANE), jnp.int32)),
        grid=(nce, bpc),
        in_specs=[pl.BlockSpec(
            (tr, LANE),
            lambda c, i: (jnp.minimum(c * bpc + i, nb - 1), 0))],
        out_specs=(pl.BlockSpec((1, SUBLANE, LANE), lambda c, i: (c, 0, 0)),
                   pl.BlockSpec((1, SUBLANE, LANE), lambda c, i: (c, 0, 0))),
        compiler_params=pltpu.CompilerParams(
            dimension_semantics=("parallel", "arbitrary")),
        cost_estimate=cost,
    )(x2d)

    total_sum = jnp.sum(sums) + tail_sum
    total_cnt = jnp.sum(cnts).astype(jnp.float32) + tail_cnt
    return total_sum / (total_cnt + jnp.float32(epsilon))


def _reference(x, margin=1.0, norm='l2', epsilon=1e-7):
    xf = x.astype(jnp.float32)
    mask = jnp.abs(xf) > margin
    if norm == 'l1':
        num = jnp.sum(jnp.where(mask, jnp.abs(xf), 0.0))
    else:
        num = jnp.sum(jnp.where(mask, xf * xf, 0.0))
    return num / (jnp.sum(mask.astype(jnp.float32)) + epsilon)


if __name__ == "__main__":
    key = jax.random.PRNGKey(0)
    k0, k1, k2, k3, k4 = jax.random.split(key, 5)

    # NCHW input like a pose/shape parameter map: [2, 4, 16, 16]
    x = jax.random.normal(k0, (2, 4, 16, 16), dtype=jnp.float32) * 2.0

    out_l2 = jax.block_until_ready(threshold_prior(x, margin=1.0, norm='l2'))
    out_l1 = jax.block_until_ready(threshold_prior(x, margin=1.0, norm='l1'))
    assert jnp.allclose(out_l2, _reference(x, 1.0, 'l2'), rtol=1e-5, atol=1e-5)
    assert jnp.allclose(out_l1, _reference(x, 1.0, 'l1'), rtol=1e-5, atol=1e-5)

    # Small tile -> multiple grid steps on the reduction axis.
    out_b = jax.block_until_ready(
        threshold_prior(x, margin=1.0, norm='l2', block_rows=8))
    assert jnp.allclose(out_b, _reference(x, 1.0, 'l2'), rtol=1e-5, atol=1e-5)

    # Non-128-aligned total: masked ragged block in-kernel + tiny JAX tail.
    y = jax.random.normal(k1, (3, 5, 7, 11), dtype=jnp.float32) * 2.0
    out_y = jax.block_until_ready(threshold_prior(y, margin=1.0, norm='l2'))
    assert jnp.allclose(out_y, _reference(y, 1.0, 'l2'), rtol=1e-5, atol=1e-5)

    # Tiny input + negative margin: pure-JAX small-input path.
    z = jax.random.normal(k2, (1, 1, 31, 31), dtype=jnp.float32)
    out_z = jax.block_until_ready(threshold_prior(z, margin=-0.5, norm='l1'))
    assert jnp.allclose(out_z, _reference(z, -0.5, 'l1'), rtol=1e-5, atol=1e-5)

    # Explicit 2-way core split with an odd block count (dummy step skipped)
    # and a ragged last block (masked in-kernel).
    w = jax.random.normal(k3, (1, 1, 101, 128), dtype=jnp.float32) * 2.0
    out_w = jax.block_until_ready(
        threshold_prior(w, margin=1.0, norm='l2', block_rows=40, num_cores=2))
    assert jnp.allclose(out_w, _reference(w, 1.0, 'l2'), rtol=1e-5, atol=1e-5)

    # Multi-chunk inner loop (unrolled fori_loop) across two blocks.
    big = jax.random.normal(k4, (4, 8, 64, 64), dtype=jnp.float32) * 2.0
    out_big = jax.block_until_ready(
        threshold_prior(big, margin=1.0, norm='l2', block_rows=512, chunk_rows=128))
    assert jnp.allclose(out_big, _reference(big, 1.0, 'l2'), rtol=1e-5, atol=1e-5)

    print("KERNEL_OK")
</pallas_src>

<mosaic_0001>
module attributes {stable_mosaic.version = 11 : i64} {
  func.func @_threshold_prior_kernel(%arg0: i32, %arg1: i32, %arg2: memref<16x128xf32, #tpu.memory_space<vmem>>, %arg3: memref<1x8x128xf32, #tpu.memory_space<vmem>>, %arg4: memref<1x8x128xi32, #tpu.memory_space<vmem>>) attributes {dimension_semantics = [#tpu.dimension_semantics<parallel>, #tpu.dimension_semantics<arbitrary>], iteration_bounds = array<i64: 1, 1>, scalar_prefetch = 0 : i64, scratch_operands = 0 : i64, tpu.core_type = #tpu.core_type<tc>, window_params = [{transform_indices = @transform_0, window_bounds = array<i64: 16, 128>}, {transform_indices = @transform_1, window_bounds = array<i64: 1, 8, 128>}, {transform_indices = @transform_2, window_bounds = array<i64: 1, 8, 128>}]} {
    %c0_i32 = arith.constant 0 : i32
    %0 = arith.cmpi eq, %arg1, %c0_i32 : i32
    %1 = arith.extui %0 : i1 to i32
    %c0_i32_0 = arith.constant 0 : i32
    %2 = arith.cmpi ne, %1, %c0_i32_0 : i32
    scf.if %2 {
      %cst_17 = arith.constant 0.000000e+00 : f32
      %22 = vector.broadcast %cst_17 : f32 to vector<1x8x128xf32>
      %c0_18 = arith.constant 0 : index
      %c0_19 = arith.constant 0 : index
      %c0_20 = arith.constant 0 : index
      %23 = vector.load %arg3[%c0_18, %c0_19, %c0_20] : memref<1x8x128xf32, #tpu.memory_space<vmem>>, vector<1x8x128xf32>
      tpu.vector_store %arg3[%c0_18, %c0_19, %c0_20], %22 {strides = array<i32>} : memref<1x8x128xf32, #tpu.memory_space<vmem>>, vector<1x8x128xf32>,
      %c0_i32_21 = arith.constant 0 : i32
      %24 = vector.broadcast %c0_i32_21 : i32 to vector<1x8x128xi32>
      %c0_22 = arith.constant 0 : index
      %c0_23 = arith.constant 0 : index
      %c0_24 = arith.constant 0 : index
      %25 = vector.load %arg4[%c0_22, %c0_23, %c0_24] : memref<1x8x128xi32, #tpu.memory_space<vmem>>, vector<1x8x128xi32>
      tpu.vector_store %arg4[%c0_22, %c0_23, %c0_24], %24 {strides = array<i32>} : memref<1x8x128xi32, #tpu.memory_space<vmem>>, vector<1x8x128xi32>,
    } else {
    }
    %c0 = arith.constant 0 : index
    %c0_1 = arith.constant 0 : index
    %3 = vector.load %arg2[%c0, %c0_1] : memref<16x128xf32, #tpu.memory_space<vmem>>, vector<16x128xf32>
    %4 = arith.mulf %3, %3 : vector<16x128xf32>
    %cst = arith.constant 1.000000e+00 : f32
    %5 = vector.broadcast %cst : f32 to vector<16x128xf32>
    %6 = arith.cmpf ogt, %4, %5 : vector<16x128xf32>
    %cst_2 = arith.constant 0.000000e+00 : f32
    %7 = vector.broadcast %cst_2 : f32 to vector<16x128xf32>
    %8 = arith.select %6, %4, %7 : vector<16x128xi1>, vector<16x128xf32>
    %9 = arith.extui %6 : vector<16x128xi1> to vector<16x128xi32>
    %c0_3 = arith.constant 0 : index
    %c0_4 = arith.constant 0 : index
    %c0_5 = arith.constant 0 : index
    %10 = vector.load %arg3[%c0_3, %c0_4, %c0_5] : memref<1x8x128xf32, #tpu.memory_space<vmem>>, vector<1x8x128xf32>
    %11 = vector.shape_cast %8 : vector<16x128xf32> to vector<2x8x128xf32>
    %cst_6 = arith.constant dense<0.000000e+00> : vector<8x128xf32>
    %12 = vector.multi_reduction <add>, %11, %cst_6 [0] : vector<2x8x128xf32> to vector<8x128xf32>
    %13 = vector.shape_cast %12 : vector<8x128xf32> to vector<1x8x128xf32>
    %14 = arith.addf %10, %13 : vector<1x8x128xf32>
    %c0_7 = arith.constant 0 : index
    %c0_8 = arith.constant 0 : index
    %c0_9 = arith.constant 0 : index
    %15 = vector.load %arg3[%c0_7, %c0_8, %c0_9] : memref<1x8x128xf32, #tpu.memory_space<vmem>>, vector<1x8x128xf32>
    tpu.vector_store %arg3[%c0_7, %c0_8, %c0_9], %14 {strides = array<i32>} : memref<1x8x128xf32, #tpu.memory_space<vmem>>, vector<1x8x128xf32>,
    %c0_10 = arith.constant 0 : index
    %c0_11 = arith.constant 0 : index
    %c0_12 = arith.constant 0 : index
    %16 = vector.load %arg4[%c0_10, %c0_11, %c0_12] : memref<1x8x128xi32, #tpu.memory_space<vmem>>, vector<1x8x128xi32>
    %17 = vector.shape_cast %9 : vector<16x128xi32> to vector<2x8x128xi32>
    %cst_13 = arith.constant dense<0> : vector<8x128xi32>
    %18 = vector.multi_reduction <add>, %17, %cst_13 [0] : vector<2x8x128xi32> to vector<8x128xi32>
    %19 = vector.shape_cast %18 : vector<8x128xi32> to vector<1x8x128xi32>
    %20 = arith.addi %16, %19 : vector<1x8x128xi32>
    %c0_14 = arith.constant 0 : index
    %c0_15 = arith.constant 0 : index
    %c0_16 = arith.constant 0 : index
    %21 = vector.load %arg4[%c0_14, %c0_15, %c0_16] : memref<1x8x128xi32, #tpu.memory_space<vmem>>, vector<1x8x128xi32>
    tpu.vector_store %arg4[%c0_14, %c0_15, %c0_16], %20 {strides = array<i32>} : memref<1x8x128xi32, #tpu.memory_space<vmem>>, vector<1x8x128xi32>,
    return
  }
  func.func @transform_0(%arg0: i32, %arg1: i32) -> (i32, i32) {
    %c1_i32 = arith.constant 1 : i32
    %0 = arith.muli %arg0, %c1_i32 : i32
    %1 = arith.addi %0, %arg1 : i32
    %c0_i32 = arith.constant 0 : i32
    %2 = arith.minsi %1, %c0_i32 : i32
    %c0_i32_0 = arith.constant 0 : i32
    %c0_i32_1 = arith.constant 0 : i32
    return %2, %c0_i32_0 : i32, i32
  }
  func.func @transform_1(%arg0: i32, %arg1: i32) -> (i32, i32, i32) {
    %c0_i32 = arith.constant 0 : i32
    %c0_i32_0 = arith.constant 0 : i32
    %c0_i32_1 = arith.constant 0 : i32
    return %arg0, %c0_i32, %c0_i32_0 : i32, i32, i32
  }
  func.func @transform_2(%arg0: i32, %arg1: i32) -> (i32, i32, i32) {
    %c0_i32 = arith.constant 0 : i32
    %c0_i32_0 = arith.constant 0 : i32
    %c0_i32_1 = arith.constant 0 : i32
    return %arg0, %c0_i32, %c0_i32_0 : i32, i32, i32
  }
}

</mosaic_0001>

<llo_original>
// kernel: tpu_custom_call.1
$region0: #{tpu_custom_call.1}
  #allocation0 [shape = 'u32[]', space=smem, size = 0x4, offset = 0x4, fixed_abs, tag = 'smem constant byte address 0x4 - core index']
  #allocation1 [shape = 'u32[144,128]{1,0:T(1,128)}', space=vmem, size = 0x12000, scoped, tag = 'internal scratch']
  %s0 = inlined_call_operand.hbm [shape: f32[16,128], index: 0, kind: input, shape index: {}]
  %s1 = inlined_call_operand.hbm [shape: f32[1,8,128], index: 1, kind: output, shape index: {0}]
  %s2 = inlined_call_operand.hbm [shape: s32[1,8,128], index: 2, kind: output, shape index: {1}]
  %3 = xla_tuple %s1, %s2
  %s4 = sld [smem:[#allocation0]]
  $region30: #{tpu_custom_call.1} parent=0
    _
  %s6 = ssub.s32 1, %s4
  %s7 = scalar_select 0, %s6, %s4
  $region1: #{tpu_custom_call.1} parent=0
    #allocation2 [shape = 'u8[8192]{0}', space=vmem, size = 0x2000, scoped, tag = 'input window, operand 0, single buffered']
    #allocation3 [shape = 's32[1]{0}', space=sflag, size = 0x4, scoped, tag = 'scoped memory for tpu_custom_call.1']
    #allocation4 [shape = 's32[1]{0}', space=sflag, size = 0x4, scoped, tag = 'scoped memory for tpu_custom_call.1']
    #allocation5 [shape = 'u8[4096]{0}', space=vmem, size = 0x1000, scoped, tag = 'output window, operand 0, single buffered']
    #allocation6 [shape = 'u8[4096]{0}', space=vmem, size = 0x1000, scoped, tag = 'output window, operand 1, single buffered']
    #allocation7 [shape = 's32[1]{0}', space=sflag, size = 0x4, scoped, tag = 'scoped memory for tpu_custom_call.1']
    %8 = vsyncpa [#allocation3], 0
    %9 = vsyncpa [#allocation4], 0
    %10 = vsyncpa [#allocation7], 0
    // Predicated region
    $region2: #{tpu_custom_call.1} parent=1 // pred_check
      _
    $region3: #{tpu_custom_call.1} parent=1 // pred_check_branch
      %12 = sbr.rel (0) target = $region5
    $region4: #{tpu_custom_call.1} parent=1 // pred_region
      %s13 = sadd.s32 0, 0
      %p14 = scmp.lt.s32.totalorder %s13, 0
      %s15 = scalar_select %p14, %s13, 0
      %s16 = smul.u32 2, %s15
      %s18 = ssub.s32 256, 256
      %19 = vsyncadd [#allocation3], %s18
      %s20 = smul.addr %s16, 128
      %s21 = scalar_lea.hbm %s0, %s20
      %s22 = sshll.u32 [#allocation2], 4
      %s23 = int_to_ptr.vmem [resolvable:$true] %s22
      %28 = dma.hbm_to_vmem [thread:$0]  %s21, 256, %s23, [#allocation3], 128, 128, 8
    $region5: #{tpu_custom_call.1} parent=1 // pred_fallthru
      _
    // Predicated region
    $region6: #{tpu_custom_call.1} parent=1 // pred_check
      _
    $region7: #{tpu_custom_call.1} parent=1 // pred_check_branch
      %30 = sbr.rel (0) target = $region9
    $region8: #{tpu_custom_call.1} parent=1 // pred_region
      %31 = dma.done [#allocation3], 256
    $region9: #{tpu_custom_call.1} parent=1 // pred_fallthru
      _
    %s32 = sadd.s32 0, 0
    %p33 = scmp.lt.s32.totalorder %s32, 0
    %s34 = scalar_select %p33, %s32, 0
    %s35 = smul.u32 2, %s34
    %p36 = scmp.eq.s32.totalorder 0, 0
    // Predicated region
    $region10: #{tpu_custom_call.1} parent=1 // pred_check
      %p37 = pneg %p36
    $region11: #{tpu_custom_call.1} parent=1 // pred_check_branch
      %39 = sbr.rel (%p37) target = $region13
    $region12: #{tpu_custom_call.1} parent=1 // pred_region
      %40 = vst [vmem:[#allocation5] sm:$0xff] 0.0
      %41 = vst [vmem:[#allocation6] sm:$0xff] 0
    $region13: #{tpu_custom_call.1} parent=1 // pred_fallthru
      _
    %v42 = vld [vmem:[#allocation2] sm:$0xff]
    %v43 = vld [vmem:[#allocation2 + $0x8] sm:$0xff]
    %v44 = vmul.f32 %v42, %v42
    %v45 = vmul.f32 %v43, %v43
    %vm46 = vcmp.gt.f32.partialorder %v44, 1.0
    %vm47 = vcmp.gt.f32.partialorder %v45, 1.0
    %v48 = vsel %vm46, %v44, 0.0
    %v49 = vsel %vm47, %v45, 0.0
    %v50 = vsel %vm46, 1, 0
    %v51 = vsel %vm47, 1, 0
    %v52 = vld [vmem:[#allocation5] sm:$0xff]
    %v53 = vadd.f32 %v48, %v49
    %v54 = vadd.f32 %v52, %v53
    %55 = vst [vmem:[#allocation5] sm:$0xff] %v54
    %v56 = vld [vmem:[#allocation6] sm:$0xff]
    %v57 = vadd.s32 %v50, %v51
    %v58 = vadd.s32 %v56, %v57
    %59 = vst [vmem:[#allocation6] sm:$0xff] %v58
    // Predicated region
    $region14: #{tpu_custom_call.1} parent=1 // pred_check
      _
    $region15: #{tpu_custom_call.1} parent=1 // pred_check_branch
      %61 = sbr.rel (0) target = $region17
    $region16: #{tpu_custom_call.1} parent=1 // pred_region
      %s63 = ssub.s32 128, 128
      %64 = vsyncadd [#allocation4], %s63
      %s66 = sshll.u32 [#allocation5], 4
      %s67 = int_to_ptr.vmem [resolvable:$true] %s66
      %69 = dma.vmem_to_hbm [thread:$0]  %s67, 128, %s1, [#allocation4]
    $region17: #{tpu_custom_call.1} parent=1 // pred_fallthru
      _
    // Predicated region
    $region18: #{tpu_custom_call.1} parent=1 // pred_check
      _
    $region19: #{tpu_custom_call.1} parent=1 // pred_check_branch
      %71 = sbr.rel (0) target = $region21
    $region20: #{tpu_custom_call.1} parent=1 // pred_region
      %s73 = ssub.s32 128, 128
      %74 = vsyncadd [#allocation7], %s73
      %s76 = sshll.u32 [#allocation6], 4
      %s77 = int_to_ptr.vmem [resolvable:$true] %s76
      %79 = dma.vmem_to_hbm [thread:$0]  %s77, 128, %s2, [#allocation7]
    $region21: #{tpu_custom_call.1} parent=1 // pred_fallthru
      _
    // Predicated region
    $region22: #{tpu_custom_call.1} parent=1 // pred_check
      _
    $region23: #{tpu_custom_call.1} parent=1 // pred_check_branch
      %81 = sbr.rel (0) target = $region25
    $region24: #{tpu_custom_call.1} parent=1 // pred_region
      %82 = dma.done [#allocation4], 128
    $region25: #{tpu_custom_call.1} parent=1 // pred_fallthru
      _
    // Predicated region
    $region26: #{tpu_custom_call.1} parent=1 // pred_check
      _
    $region27: #{tpu_custom_call.1} parent=1 // pred_check_branch
      %84 = sbr.rel (0) target = $region29
    $region28: #{tpu_custom_call.1} parent=1 // pred_region
      %85 = dma.done [#allocation7], 128
    $region29: #{tpu_custom_call.1} parent=1 // pred_fallthru
      _
    %86 = vsyncpa [#allocation3], 1
    %87 = vsyncpa [#allocation4], 1
    %88 = vsyncpa [#allocation7], 1

</llo_original>
